<compile_context>
chip_gen: v7x
topology: tpu7x:2x2x1
jax: 0.10.0
libtpu: 0.0.40
codegen_flags: <defaults>
</compile_context>

<pallas_src>
import jax
import jax.numpy as jnp
import numpy as np
from jax.experimental import pallas as pl
from jax.experimental.pallas import tpu as pltpu


def _gather_sum_kernel(idx_ref, table_ref, out_ref, stage_ref, sem_ref):
    """One batch tile: DMA-gather batch_tile*L table rows, sum over layers.

    idx_ref   : SMEM [b_pad * L] int32      hashed indices, row-major (row, layer)
    table_ref : HBM  [H, E_pad]             embedding table (memory_space=pl.ANY)
    out_ref   : VMEM [batch_tile, E_pad]    output tile for this grid step
    stage_ref : VMEM [L, batch_tile, E_pad] gather staging buffer
    sem_ref   : DMA semaphore (1,)          shared by every row gather this step
    """
    num_layers, bt_rows, _ = stage_ref.shape
    bt = pl.program_id(0)
    base = bt * (bt_rows * num_layers)

    # Issue every row gather for this tile up front: batch_tile*L small DMAs,
    # all in flight simultaneously on the same semaphore.
    @pl.loop(0, bt_rows)
    def _(r):
        off = base + r * num_layers
        for l in range(num_layers):              # static unroll, L is tiny
            row = idx_ref[off + l]
            pltpu.make_async_copy(
                table_ref.at[pl.ds(row, 1), :],
                stage_ref.at[l, pl.ds(r, 1), :],
                sem_ref.at[0],
            ).start()

    # The per-row copies exactly tile stage_ref, so one whole-buffer wait on
    # the shared semaphore waits for all of them.
    pltpu.make_async_copy(stage_ref, stage_ref, sem_ref.at[0]).wait()

    # Dense f32 accumulation over the layer axis, one unmasked full-tile store.
    acc = stage_ref[0].astype(jnp.float32)
    for l in range(1, num_layers):
        acc = acc + stage_ref[l].astype(jnp.float32)
    out_ref[...] = acc.astype(out_ref.dtype)


def _round_up(x, m):
    return ((x + m - 1) // m) * m


def prefix_ngram_embedding_forward(codes_list, embed_table, *, codebook_size,
                                   hash_size, batch_tile=256):
    """PrefixNgramEmbedding.forward(codes) -> summed embeddings [B, embed_dim].

    codes_list : list of num_layers int arrays, each [B], values in [0, codebook_size)
    embed_table: [hash_size, embed_dim] float array (nn.Embedding weight)
    batch_tile : output rows per grid step (clamped / rounded to a multiple of 8).
    """
    num_layers = len(codes_list)
    codes = jnp.stack([c.astype(jnp.int32) for c in codes_list], axis=0)  # [L, B]
    L, B = codes.shape
    H, E = embed_table.shape
    assert H == hash_size

    # ---- get_prefix_ngrams + "% hash_size" (module steps 1+2) ----------------
    # Horner recurrence with the modulus applied at each step: identical result
    # to the module's int64 prefix % hash_size, int32-safe as long as
    # (hash_size-1)*codebook_size + codebook_size-1 < 2**31 (true for defaults).
    assert (hash_size - 1) * codebook_size + (codebook_size - 1) < 2**31, (
        "int32 incremental-mod prefix hashing would overflow for this config")
    prefix = jnp.zeros((B,), jnp.int32)
    idx_layers = []
    for layer in range(L):
        prefix = (prefix * jnp.int32(codebook_size) + codes[layer]) % jnp.int32(hash_size)
        idx_layers.append(prefix)
    idx = jnp.stack(idx_layers, axis=1)                        # [B, L] int32

    # ---- tiling / padding -----------------------------------------------------
    bt_rows = max(8, min(_round_up(batch_tile, 8), _round_up(B, 8)))
    num_bt = pl.cdiv(B, bt_rows)
    b_pad = num_bt * bt_rows
    if b_pad != B:
        idx = jnp.pad(idx, ((0, b_pad - B), (0, 0)))           # padded rows gather row 0
    idx_flat = idx.reshape(-1)                                 # [b_pad * L], row-major (row, layer)

    E_pad = _round_up(E, 128)                                  # lane-dense stores
    table_p = embed_table if E_pad == E else jnp.pad(
        embed_table, ((0, 0), (0, E_pad - E)))

    itemsize = int(np.dtype(embed_table.dtype).itemsize)
    stage_bytes = L * bt_rows * E_pad * itemsize
    out_bytes = 2 * bt_rows * E_pad * itemsize                 # double-buffered out blocks
    vmem_limit = int(min(64 << 20, max(16 << 20, 2 * (stage_bytes + out_bytes))))

    cost = pl.CostEstimate(
        flops=b_pad * L * E_pad,                               # the adds
        transcendentals=0,
        bytes_accessed=(b_pad * L * E_pad + b_pad * E_pad) * itemsize
        + b_pad * L * 4,
    )

    out = pl.pallas_call(
        _gather_sum_kernel,
        out_shape=jax.ShapeDtypeStruct((b_pad, E_pad), embed_table.dtype),
        grid_spec=pltpu.PrefetchScalarGridSpec(
            num_scalar_prefetch=1,
            grid=(num_bt,),
            in_specs=[pl.BlockSpec(memory_space=pl.ANY)],      # table stays in HBM
            out_specs=pl.BlockSpec((bt_rows, E_pad), lambda b, _idx: (b, 0)),
            scratch_shapes=[
                pltpu.VMEM((L, bt_rows, E_pad), embed_table.dtype),
                pltpu.SemaphoreType.DMA((1,)),
            ],
        ),
        compiler_params=pltpu.CompilerParams(
            dimension_semantics=("parallel",),
            vmem_limit_bytes=vmem_limit,
        ),
        cost_estimate=cost,
    )(idx_flat, table_p)

    return out[:B, :E]


def _reference_forward(codes_list, embed_table, codebook_size, hash_size):
    """Plain-JAX mirror of the PyTorch PrefixNgramEmbedding.forward semantics."""
    num_layers = len(codes_list)
    out = jnp.zeros((codes_list[0].shape[0], embed_table.shape[1]), embed_table.dtype)
    for layer_index in range(1, num_layers + 1):
        prefix = jnp.zeros_like(codes_list[0])
        for i, c in enumerate(codes_list[:layer_index]):
            prefix = prefix + c * (codebook_size ** (layer_index - 1 - i))
        index = prefix % hash_size
        out = out + embed_table[index]
    return out


if __name__ == "__main__":
    # Small, deterministic problem consistent with the module's forward.
    NUM_LAYERS = 3
    CODEBOOK_SIZE = 64      # module default is 2048; kept small for the demo
    EMBED_DIM = 128         # multiple of 128 -> lane-dense output stores
    HASH_SIZE = 4096        # module default is 1e6; kept small for the demo
    BATCH = 16

    key = jax.random.PRNGKey(0)
    k_codes, k_table = jax.random.split(key)
    codes = jax.random.randint(k_codes, (NUM_LAYERS, BATCH), 0, CODEBOOK_SIZE,
                               dtype=jnp.int32)
    embed_table = jax.random.normal(k_table, (HASH_SIZE, EMBED_DIM), jnp.float32)
    codes_list = [codes[i] for i in range(NUM_LAYERS)]

    out = prefix_ngram_embedding_forward(
        codes_list, embed_table,
        codebook_size=CODEBOOK_SIZE, hash_size=HASH_SIZE)
    out = jax.block_until_ready(out)

    ref = _reference_forward(codes_list, embed_table, CODEBOOK_SIZE, HASH_SIZE)
    assert out.shape == (BATCH, EMBED_DIM), out.shape
    assert np.allclose(np.asarray(out), np.asarray(ref), atol=1e-5), "embedding-sum mismatch"

    print("KERNEL_OK")
</pallas_src>

<mosaic_0001>
module attributes {stable_mosaic.version = 11 : i64} {
  func.func @_gather_sum_kernel(%arg0: i32, %arg1: memref<48xi32, #tpu.memory_space<smem>>, %arg2: memref<4096x128xf32, #tpu.memory_space<any>>, %arg3: memref<16x128xf32, #tpu.memory_space<vmem>>, %arg4: memref<3x16x128xf32, #tpu.memory_space<vmem>>, %arg5: memref<1x!tpu.dma_semaphore, #tpu.memory_space<semaphore_mem>>) attributes {dimension_semantics = [#tpu.dimension_semantics<parallel>], iteration_bounds = array<i64: 1>, scalar_prefetch = 1 : i64, scratch_operands = 2 : i64, tpu.core_type = #tpu.core_type<tc>, window_params = [{}, {transform_indices = @transform_1, window_bounds = array<i64: 16, 128>}]} {
    %c48_i32 = arith.constant 48 : i32
    %0 = arith.muli %arg0, %c48_i32 : i32
    %c0_i32 = arith.constant 0 : i32
    %c16_i32 = arith.constant 16 : i32
    %1 = arith.addi %c0_i32, %c16_i32 : i32
    %c1_i32 = arith.constant 1 : i32
    scf.for %arg6 = %c0_i32 to %1 step %c1_i32  : i32 {
      %c1_i32_10 = arith.constant 1 : i32
      %13 = arith.muli %arg6, %c1_i32_10 : i32
      %c0_i32_11 = arith.constant 0 : i32
      %14 = arith.addi %c0_i32_11, %13 : i32
      %c3_i32 = arith.constant 3 : i32
      %15 = arith.muli %14, %c3_i32 : i32
      %16 = arith.addi %0, %15 : i32
      %c0_i32_12 = arith.constant 0 : i32
      %17 = arith.addi %16, %c0_i32_12 : i32
      %18 = arith.index_cast %17 : i32 to index
      %19 = memref.load %arg1[%18] : memref<48xi32, #tpu.memory_space<smem>>
      %c0_i32_13 = arith.constant 0 : i32
      %c0_i32_14 = arith.constant 0 : i32
      %c0_i32_15 = arith.constant 0 : i32
      %20 = tpu.memref_slice %arg2[%19, %c0_i32_15] : memref<4096x128xf32, #tpu.memory_space<any>> -> memref<1x128xf32, #tpu.memory_space<any>>
      %c0_i32_16 = arith.constant 0 : i32
      %21 = tpu.memref_slice %arg4[%c0_i32_13, %14, %c0_i32_16] : memref<3x16x128xf32, #tpu.memory_space<vmem>> -> memref<1x1x128xf32, #tpu.memory_space<vmem>>
      %22 = tpu.memref_squeeze %21 : memref<1x1x128xf32, #tpu.memory_space<vmem>> -> memref<1x128xf32, #tpu.memory_space<vmem>>
      %23 = tpu.memref_slice %arg5[%c0_i32_14] : memref<1x!tpu.dma_semaphore, #tpu.memory_space<semaphore_mem>> -> memref<1x!tpu.dma_semaphore, #tpu.memory_space<semaphore_mem>>
      %24 = tpu.memref_squeeze %23 : memref<1x!tpu.dma_semaphore, #tpu.memory_space<semaphore_mem>> -> memref<!tpu.dma_semaphore, #tpu.memory_space<semaphore_mem>>
      tpu.enqueue_dma source(%20 : memref<1x128xf32, #tpu.memory_space<any>>) target(%22 : memref<1x128xf32, #tpu.memory_space<vmem>>) target_semaphore(%24 : memref<!tpu.dma_semaphore, #tpu.memory_space<semaphore_mem>>)
      %c1_i32_17 = arith.constant 1 : i32
      %25 = arith.addi %16, %c1_i32_17 : i32
      %26 = arith.index_cast %25 : i32 to index
      %27 = memref.load %arg1[%26] : memref<48xi32, #tpu.memory_space<smem>>
      %c1_i32_18 = arith.constant 1 : i32
      %c0_i32_19 = arith.constant 0 : i32
      %c0_i32_20 = arith.constant 0 : i32
      %28 = tpu.memref_slice %arg2[%27, %c0_i32_20] : memref<4096x128xf32, #tpu.memory_space<any>> -> memref<1x128xf32, #tpu.memory_space<any>>
      %c0_i32_21 = arith.constant 0 : i32
      %29 = tpu.memref_slice %arg4[%c1_i32_18, %14, %c0_i32_21] : memref<3x16x128xf32, #tpu.memory_space<vmem>> -> memref<1x1x128xf32, #tpu.memory_space<vmem>>
      %30 = tpu.memref_squeeze %29 : memref<1x1x128xf32, #tpu.memory_space<vmem>> -> memref<1x128xf32, #tpu.memory_space<vmem>>
      %31 = tpu.memref_slice %arg5[%c0_i32_19] : memref<1x!tpu.dma_semaphore, #tpu.memory_space<semaphore_mem>> -> memref<1x!tpu.dma_semaphore, #tpu.memory_space<semaphore_mem>>
      %32 = tpu.memref_squeeze %31 : memref<1x!tpu.dma_semaphore, #tpu.memory_space<semaphore_mem>> -> memref<!tpu.dma_semaphore, #tpu.memory_space<semaphore_mem>>
      tpu.enqueue_dma source(%28 : memref<1x128xf32, #tpu.memory_space<any>>) target(%30 : memref<1x128xf32, #tpu.memory_space<vmem>>) target_semaphore(%32 : memref<!tpu.dma_semaphore, #tpu.memory_space<semaphore_mem>>)
      %c2_i32 = arith.constant 2 : i32
      %33 = arith.addi %16, %c2_i32 : i32
      %34 = arith.index_cast %33 : i32 to index
      %35 = memref.load %arg1[%34] : memref<48xi32, #tpu.memory_space<smem>>
      %c2_i32_22 = arith.constant 2 : i32
      %c0_i32_23 = arith.constant 0 : i32
      %c0_i32_24 = arith.constant 0 : i32
      %36 = tpu.memref_slice %arg2[%35, %c0_i32_24] : memref<4096x128xf32, #tpu.memory_space<any>> -> memref<1x128xf32, #tpu.memory_space<any>>
      %c0_i32_25 = arith.constant 0 : i32
      %37 = tpu.memref_slice %arg4[%c2_i32_22, %14, %c0_i32_25] : memref<3x16x128xf32, #tpu.memory_space<vmem>> -> memref<1x1x128xf32, #tpu.memory_space<vmem>>
      %38 = tpu.memref_squeeze %37 : memref<1x1x128xf32, #tpu.memory_space<vmem>> -> memref<1x128xf32, #tpu.memory_space<vmem>>
      %39 = tpu.memref_slice %arg5[%c0_i32_23] : memref<1x!tpu.dma_semaphore, #tpu.memory_space<semaphore_mem>> -> memref<1x!tpu.dma_semaphore, #tpu.memory_space<semaphore_mem>>
      %40 = tpu.memref_squeeze %39 : memref<1x!tpu.dma_semaphore, #tpu.memory_space<semaphore_mem>> -> memref<!tpu.dma_semaphore, #tpu.memory_space<semaphore_mem>>
      tpu.enqueue_dma source(%36 : memref<1x128xf32, #tpu.memory_space<any>>) target(%38 : memref<1x128xf32, #tpu.memory_space<vmem>>) target_semaphore(%40 : memref<!tpu.dma_semaphore, #tpu.memory_space<semaphore_mem>>)
    }
    %c16_i32_0 = arith.constant 16 : i32
    %c0_i32_1 = arith.constant 0 : i32
    %2 = tpu.memref_slice %arg5[%c0_i32_1] : memref<1x!tpu.dma_semaphore, #tpu.memory_space<semaphore_mem>> -> memref<1x!tpu.dma_semaphore, #tpu.memory_space<semaphore_mem>>
    %3 = tpu.memref_squeeze %2 : memref<1x!tpu.dma_semaphore, #tpu.memory_space<semaphore_mem>> -> memref<!tpu.dma_semaphore, #tpu.memory_space<semaphore_mem>>
    tpu.wait_dma2 semaphore(%3 : memref<!tpu.dma_semaphore, #tpu.memory_space<semaphore_mem>>) src(%arg4 : memref<3x16x128xf32, #tpu.memory_space<vmem>>) dst(%arg4 : memref<3x16x128xf32, #tpu.memory_space<vmem>>)
    %c0 = arith.constant 0 : index
    %c0_2 = arith.constant 0 : index
    %c0_3 = arith.constant 0 : index
    %4 = vector.load %arg4[%c0, %c0_2, %c0_3] : memref<3x16x128xf32, #tpu.memory_space<vmem>>, vector<1x16x128xf32>
    %5 = vector.shape_cast %4 : vector<1x16x128xf32> to vector<16x128xf32>
    %c1 = arith.constant 1 : index
    %c0_4 = arith.constant 0 : index
    %c0_5 = arith.constant 0 : index
    %6 = vector.load %arg4[%c1, %c0_4, %c0_5] : memref<3x16x128xf32, #tpu.memory_space<vmem>>, vector<1x16x128xf32>
    %7 = vector.shape_cast %6 : vector<1x16x128xf32> to vector<16x128xf32>
    %8 = arith.addf %5, %7 : vector<16x128xf32>
    %c2 = arith.constant 2 : index
    %c0_6 = arith.constant 0 : index
    %c0_7 = arith.constant 0 : index
    %9 = vector.load %arg4[%c2, %c0_6, %c0_7] : memref<3x16x128xf32, #tpu.memory_space<vmem>>, vector<1x16x128xf32>
    %10 = vector.shape_cast %9 : vector<1x16x128xf32> to vector<16x128xf32>
    %11 = arith.addf %8, %10 : vector<16x128xf32>
    %c0_8 = arith.constant 0 : index
    %c0_9 = arith.constant 0 : index
    %12 = vector.load %arg3[%c0_8, %c0_9] : memref<16x128xf32, #tpu.memory_space<vmem>>, vector<16x128xf32>
    tpu.vector_store %arg3[%c0_8, %c0_9], %11 {strides = array<i32>} : memref<16x128xf32, #tpu.memory_space<vmem>>, vector<16x128xf32>,
    return
  }
  func.func @transform_1(%arg0: i32, %arg1: memref<48xi32, #tpu.memory_space<smem>>) -> (i32, i32) {
    %c0_i32 = arith.constant 0 : i32
    %c0_i32_0 = arith.constant 0 : i32
    return %arg0, %c0_i32 : i32, i32
  }
}

</mosaic_0001>

<llo_original>
// kernel: tpu_custom_call.1
$region0: #{tpu_custom_call.1}
  #allocation0 [shape = 'u32[]', space=smem, size = 0x4, offset = 0x4, fixed_abs, tag = 'smem constant byte address 0x4 - core index']
  #allocation1 [shape = 'u32[144,128]{1,0:T(1,128)}', space=vmem, size = 0x12000, scoped, tag = 'internal scratch']
  #allocation2 [shape = 'f32[3,16,128]{2,1,0:T(8,128)}', space=vmem, size = 0x6000, scoped, tag = 'scratch operand']
  #allocation3 [shape = 's32[1]{0}', space=sflag, size = 0x4, scoped, tag = 'scratch operand']
  #allocation4 [shape = 's32[1]{0}', space=sflag, size = 0x4, scoped, tag = 'scoped memory for tpu_custom_call.1']
  #allocation5 [shape = 'u8[512]{0}', space=smem, size = 0x200, scoped, tag = 'prefetched SMEM operand 0']
  #allocation8 [shape = 's32[]', space=sflag, size = 0x4, offset = 0, fixed_abs, tag = 'sflag constant byte address 0x0 - dummy sync flag']
  #allocation9 [shape = 's32[]', space=sflag, size = 0x4, offset = 0, fixed_abs, tag = 'sflag constant byte address 0x0 - dummy sync flag']
  #allocation10 [shape = 'u32[]', space=smem, size = 0x4, offset = 0x44, fixed_abs, tag = 'smem constant byte address 0x44 - assertion arg 0']
  #allocation11 [shape = 'u32[]', space=smem, size = 0x4, offset = 0x48, fixed_abs, tag = 'smem constant byte address 0x48 - assertion arg 1']
  #allocation12 [shape = 's32[]', space=sflag, size = 0x4, offset = 0, fixed_abs, tag = 'sflag constant byte address 0x0 - dummy sync flag']
  #allocation13 [shape = 's32[]', space=sflag, size = 0x4, offset = 0, fixed_abs, tag = 'sflag constant byte address 0x0 - dummy sync flag']
  #allocation14 [shape = 's32[]', space=sflag, size = 0x4, offset = 0, fixed_abs, tag = 'sflag constant byte address 0x0 - dummy sync flag']
  #allocation15 [shape = 's32[]', space=sflag, size = 0x4, offset = 0, fixed_abs, tag = 'sflag constant byte address 0x0 - dummy sync flag']
  %s0 = inlined_call_operand.hbm [shape: s32[48], index: 0, kind: input, shape index: {}]
  %s1 = inlined_call_operand.hbm [shape: f32[4096,128], index: 1, kind: input, shape index: {}]
  %s2 = inlined_call_operand.hbm [shape: f32[16,128], index: 2, kind: output, shape index: {}]
  %s3 = sld [smem:[#allocation0]]
  $region29: #{tpu_custom_call.1} parent=0
    _
  %s5 = ssub.s32 1, %s3
  %s6 = scalar_select 0, %s5, %s3
  %8 = dma.hbm_to_smem %s0, 16, [#allocation5], [#allocation4]
  %9 = dma.done [#allocation4], 16
  %10 = sfence
  $region1: #{tpu_custom_call.1} parent=0
    #allocation6 [shape = 'u8[8192]{0}', space=vmem, size = 0x2000, scoped, tag = 'output window, operand 0, single buffered']
    #allocation7 [shape = 's32[1]{0}', space=sflag, size = 0x4, scoped, tag = 'scoped memory for tpu_custom_call.1']
    %11 = vsyncpa [#allocation7], 0
    %s12 = smul.u32 0, 48
    loop: start=0, step=1, limit=16
    $region2: #{tpu_custom_call.1} parent=1 // loop_pre_header
      _
    $region3: #{tpu_custom_call.1} parent=1 // loop_header
      %s14 = sphi 0, %s18
      %p15 = scmp.ge.s32.totalorder %s14, 16
    $region4: #{tpu_custom_call.1} parent=1 // loop_header_branch
      %17 = sbr.rel (%p15) target = $region8
    $region5: #{tpu_custom_call.1} parent=1 // loop_body
      %s19 = smul.u32 %s14, 3
      %s20 = sadd.s32 %s12, %s19
      %s21 = sld [smem:[#allocation5 + %s20]]
      %s22 = smul.addr %s21, 16
      %s23 = scalar_lea.hbm %s1, %s22
      %s24 = scalar_lea.vmem [#allocation2], %s14
      // Predicated region
      $region9: #{tpu_custom_call.1} parent=5 // pred_check
        _
      $region10: #{tpu_custom_call.1} parent=5 // pred_check_branch
        %26 = sbr.rel target = $region12
      $region11: #{tpu_custom_call.1} parent=5 // pred_region
        %27 = sst [smem:[#allocation10]] [#allocation9]
        %28 = sst [smem:[#allocation11]] [#allocation8]
      $region12: #{tpu_custom_call.1} parent=5 // pred_fallthru
        _
      %30 = shalt.err (0)
      %s32 = sshll.u32 %s24, 4
      %s33 = int_to_ptr.vmem [resolvable:$true] %s32
      %35 = dma.hbm_to_vmem [thread:$0]  %s23, 16, %s33, [#allocation3]
      %s36 = sadd.s32 %s20, 1
      %s37 = sld [smem:[#allocation5 + %s36]]
      %s38 = smul.addr %s37, 16
      %s39 = scalar_lea.hbm %s1, %s38
      %s40 = sadd.s32 %s14, 16
      %s41 = scalar_lea.vmem [#allocation2], %s40
      // Predicated region
      $region13: #{tpu_custom_call.1} parent=5 // pred_check
        _
      $region14: #{tpu_custom_call.1} parent=5 // pred_check_branch
        %43 = sbr.rel target = $region16
      $region15: #{tpu_custom_call.1} parent=5 // pred_region
        %44 = sst [smem:[#allocation10]] [#allocation13]
        %45 = sst [smem:[#allocation11]] [#allocation12]
      $region16: #{tpu_custom_call.1} parent=5 // pred_fallthru
        _
      %47 = shalt.err (0)
      %s49 = sshll.u32 %s41, 4
      %s50 = int_to_ptr.vmem [resolvable:$true] %s49
      %52 = dma.hbm_to_vmem [thread:$0]  %s39, 16, %s50, [#allocation3]
      %s53 = sadd.s32 %s20, 2
      %s54 = sld [smem:[#allocation5 + %s53]]
      %s55 = smul.addr %s54, 16
      %s56 = scalar_lea.hbm %s1, %s55
      %s57 = sadd.s32 %s14, 32
      %s58 = scalar_lea.vmem [#allocation2], %s57
      // Predicated region
      $region17: #{tpu_custom_call.1} parent=5 // pred_check
        _
      $region18: #{tpu_custom_call.1} parent=5 // pred_check_branch
        %60 = sbr.rel target = $region20
      $region19: #{tpu_custom_call.1} parent=5 // pred_region
        %61 = sst [smem:[#allocation10]] [#allocation15]
        %62 = sst [smem:[#allocation11]] [#allocation14]
      $region20: #{tpu_custom_call.1} parent=5 // pred_fallthru
        _
      %64 = shalt.err (0)
      %s66 = sshll.u32 %s58, 4
      %s67 = int_to_ptr.vmem [resolvable:$true] %s66
      %69 = dma.hbm_to_vmem [thread:$0]  %s56, 16, %s67, [#allocation3]
    $region6: #{tpu_custom_call.1} parent=1 // loop_footer
      %s18 = sadd.s32 1, %s14
    $region7: #{tpu_custom_call.1} parent=1 // loop_footer_branch
      %13 = sbr.rel target = $region3
    $region8: #{tpu_custom_call.1} parent=1 // loop_exit
      _
    %s70 = smul.u32 3, 16
    %s71 = smul.u32 %s70, 1
    %s72 = sshll.u32 %s71, 4
    %73 = dma.done [#allocation3], %s72
    %v74 = vld [vmem:[#allocation2] sm:$0xff]
    %v75 = vld [vmem:[#allocation2 + $0x8] sm:$0xff]
    %s76 = scalar_lea.vmem [#allocation2], 16
    %v77 = vld [vmem:[%s76] sm:$0xff]
    %v78 = vld [vmem:[%s76 + $0x8] sm:$0xff]
    %v79 = vadd.f32 %v74, %v77
    %v80 = vadd.f32 %v75, %v78
    %s81 = scalar_lea.vmem [#allocation2], 32
    %v82 = vld [vmem:[%s81] sm:$0xff]
    %v83 = vld [vmem:[%s81 + $0x8] sm:$0xff]
    %v84 = vadd.f32 %v79, %v82
    %v85 = vadd.f32 %v80, %v83
    %86 = vst [vmem:[#allocation6] sm:$0xff] %v84
    %87 = vst [vmem:[#allocation6 + $0x8] sm:$0xff] %v85
    // Predicated region
    $region21: #{tpu_custom_call.1} parent=1 // pred_check
      _
    $region22: #{tpu_custom_call.1} parent=1 // pred_check_branch
      %89 = sbr.rel (0) target = $region24
    $region23: #{tpu_custom_call.1} parent=1 // pred_region
      %s91 = ssub.s32 256, 256
      %92 = vsyncadd [#allocation7], %s91
      %s93 = sshll.u32 [#allocation6], 4
      %s94 = int_to_ptr.vmem [resolvable:$true] %s93
      %99 = dma.vmem_to_hbm [thread:$0]  %s94, 256, %s2, [#allocation7], 128, 128, 8
    $region24: #{tpu_custom_call.1} parent=1 // pred_fallthru
      _
    // Predicated region
    $region25: #{tpu_custom_call.1} parent=1 // pred_check
      _
    $region26: #{tpu_custom_call.1} parent=1 // pred_check_branch
      %101 = sbr.rel (0) target = $region28
    $region27: #{tpu_custom_call.1} parent=1 // pred_region
      %102 = dma.done [#allocation7], 256
    $region28: #{tpu_custom_call.1} parent=1 // pred_fallthru
      _
    %103 = vsyncpa [#allocation7], 1
  %104 = vsyncmov [#allocation3]
  %s105 = vpop.sfrf %104
  %p106 = scmp.eq.s32.totalorder %s105, 0
  %p107 = pneg %p106
  %109 = shalt.err (%p107)

</llo_original>
